<compile_context>
chip_gen: v5e
topology: v5e:2x2
jax: 0.10.0
libtpu: 0.0.40
codegen_flags: <defaults>
</compile_context>

<pallas_src>
import functools
import math

import jax
import jax.numpy as jnp
from jax.experimental import pallas as pl
from jax.experimental.pallas import tpu as pltpu


def _round_up(n, m):
    return (n + m - 1) // m * m


def _mlp_fused_kernel(*refs, num_layers):
    """refs = (x, w_0..w_{L-1}, b_0..b_{L-1}, out); whole MLP in one kernel."""
    x_ref = refs[0]
    w_refs = refs[1:1 + num_layers]
    b_refs = refs[1 + num_layers:1 + 2 * num_layers]
    o_ref = refs[1 + 2 * num_layers]

    h = x_ref[...].astype(jnp.float32)
    for i in range(num_layers):
        # bf16 MXU inputs, f32 accumulation.
        y = jnp.dot(h.astype(jnp.bfloat16), w_refs[i][...],
                    preferred_element_type=jnp.float32)
        y = y + b_refs[i][...].astype(jnp.float32)
        if i < num_layers - 1:          # torch.relu on all but the last layer
            y = jnp.maximum(y, 0.0)
        h = y
    o_ref[...] = h.astype(o_ref.dtype)


def mlp_forward(x, weights, biases, *, block_m=256):
    """Fused MLP: x (..., D_in) -> (..., D_out).

    weights: list of (D_i, D_{i+1}) f32 arrays, biases: list of (D_{i+1},) f32.
    """
    num_layers = len(weights)
    assert num_layers >= 1 and len(biases) == num_layers

    lead = x.shape[:-1]
    d_in = x.shape[-1]
    d_out = weights[-1].shape[1]
    M = int(math.prod(lead)) if lead else 1

    # Padded (lane/sublane-dense) sizes.
    dims = [d_in] + [w.shape[1] for w in weights]
    pdims = [_round_up(d, 128) for d in dims]
    block_m = max(8, min(block_m, _round_up(M, 8)))   # multiple of 8
    Mp = _round_up(M, block_m)

    # Zero-padded operands (exact: padded lanes stay zero through the net).
    x2 = x.reshape(M, d_in)
    xp = jnp.zeros((Mp, pdims[0]), x.dtype).at[:M, :d_in].set(x2)

    wps, bps = [], []
    for i, (w, b) in enumerate(zip(weights, biases)):
        wp = jnp.zeros((pdims[i], pdims[i + 1]), jnp.bfloat16)
        wp = wp.at[:w.shape[0], :w.shape[1]].set(w.astype(jnp.bfloat16))
        bp = jnp.zeros((1, pdims[i + 1]), jnp.float32)
        bp = bp.at[:, :b.shape[0]].set(b.astype(jnp.float32))
        wps.append(wp)
        bps.append(bp)

    # BlockSpecs: tile rows, keep (small) weights/biases whole and resident.
    in_specs = [pl.BlockSpec((block_m, pdims[0]), lambda i: (i, 0))]
    for li in range(num_layers):
        in_specs.append(pl.BlockSpec((pdims[li], pdims[li + 1]), lambda i: (0, 0)))
    for li in range(num_layers):
        in_specs.append(pl.BlockSpec((1, pdims[li + 1]), lambda i: (0, 0)))
    out_spec = pl.BlockSpec((block_m, pdims[-1]), lambda i: (i, 0))

    out = pl.pallas_call(
        functools.partial(_mlp_fused_kernel, num_layers=num_layers),
        out_shape=jax.ShapeDtypeStruct((Mp, pdims[-1]), x.dtype),
        grid=(Mp // block_m,),
        in_specs=in_specs,
        out_specs=out_spec,
        compiler_params=pltpu.CompilerParams(
            dimension_semantics=("parallel",)),   # shards row tiles on v7x's 2 TCs
    )(xp, *wps, *bps)

    return out[:M, :d_out].reshape(lead + (d_out,))


# ----------------------------------------------------------------------------
# Driver
# ----------------------------------------------------------------------------

if __name__ == "__main__":
    INPUT_DIM, HIDDEN_DIM, OUTPUT_DIM, NUM_LAYERS = 32, 64, 2, 3
    B, S = 2, 8   # batch=2, seq=8 -> x: (2, 8, 32)

    root = jax.random.PRNGKey(0)
    k_x, k_p = jax.random.split(root)
    x = jax.random.normal(k_x, (B, S, INPUT_DIM), jnp.float32)

    # PyTorch nn.Linear-style init: uniform(-1/sqrt(fan_in), 1/sqrt(fan_in)).
    dims = [INPUT_DIM] + [HIDDEN_DIM] * (NUM_LAYERS - 1) + [OUTPUT_DIM]
    weights, biases = [], []
    keys = jax.random.split(k_p, NUM_LAYERS)
    for i in range(NUM_LAYERS):
        kw, kb = jax.random.split(keys[i])
        lim = 1.0 / math.sqrt(dims[i])
        weights.append(
            jax.random.uniform(kw, (dims[i], dims[i + 1]), jnp.float32, -lim, lim))
        biases.append(
            jax.random.uniform(kb, (dims[i + 1],), jnp.float32, -lim, lim))

    out = mlp_forward(x, weights, biases)
    out = jax.block_until_ready(out)

    # Pure-JAX f32 reference of MLP.forward.
    ref = x
    for i, (w, b) in enumerate(zip(weights, biases)):
        ref = ref @ w + b
        if i < NUM_LAYERS - 1:
            ref = jnp.maximum(ref, 0.0)

    assert out.shape == (B, S, OUTPUT_DIM), out.shape
    assert bool(jnp.all(jnp.isfinite(out)))
    max_err = float(jnp.max(jnp.abs(out - ref)))
    # bf16 MXU inputs with f32 accumulation -> small relative error vs f32 ref.
    assert max_err < 5e-2, f"max abs error vs reference too large: {max_err}"

    print("KERNEL_OK")
</pallas_src>

<mosaic_0001>
module attributes {stable_mosaic.version = 11 : i64} {
  func.func @_mlp_fused_kernel(%arg0: i32, %arg1: memref<16x128xf32, #tpu.memory_space<vmem>>, %arg2: memref<128x128xbf16, #tpu.memory_space<vmem>>, %arg3: memref<128x128xbf16, #tpu.memory_space<vmem>>, %arg4: memref<128x128xbf16, #tpu.memory_space<vmem>>, %arg5: memref<1x128xf32, #tpu.memory_space<vmem>>, %arg6: memref<1x128xf32, #tpu.memory_space<vmem>>, %arg7: memref<1x128xf32, #tpu.memory_space<vmem>>, %arg8: memref<16x128xf32, #tpu.memory_space<vmem>>) attributes {dimension_semantics = [#tpu.dimension_semantics<parallel>], iteration_bounds = array<i64: 1>, scalar_prefetch = 0 : i64, scratch_operands = 0 : i64, tpu.core_type = #tpu.core_type<tc>, window_params = [{transform_indices = @transform_0, window_bounds = array<i64: 16, 128>}, {pipeline_mode = #tpu.pipeline_mode<synchronous>, transform_indices = @transform_1, window_bounds = array<i64: 128, 128>}, {pipeline_mode = #tpu.pipeline_mode<synchronous>, transform_indices = @transform_2, window_bounds = array<i64: 128, 128>}, {pipeline_mode = #tpu.pipeline_mode<synchronous>, transform_indices = @transform_3, window_bounds = array<i64: 128, 128>}, {pipeline_mode = #tpu.pipeline_mode<synchronous>, transform_indices = @transform_4, window_bounds = array<i64: 1, 128>}, {pipeline_mode = #tpu.pipeline_mode<synchronous>, transform_indices = @transform_5, window_bounds = array<i64: 1, 128>}, {pipeline_mode = #tpu.pipeline_mode<synchronous>, transform_indices = @transform_6, window_bounds = array<i64: 1, 128>}, {transform_indices = @transform_7, window_bounds = array<i64: 16, 128>}]} {
    %c0 = arith.constant 0 : index
    %c0_0 = arith.constant 0 : index
    %0 = vector.load %arg1[%c0, %c0_0] : memref<16x128xf32, #tpu.memory_space<vmem>>, vector<16x128xf32>
    %1 = arith.truncf %0 : vector<16x128xf32> to vector<16x128xbf16>
    %c0_1 = arith.constant 0 : index
    %c0_2 = arith.constant 0 : index
    %2 = vector.load %arg2[%c0_1, %c0_2] : memref<128x128xbf16, #tpu.memory_space<vmem>>, vector<128x128xbf16>
    %cst = arith.constant dense<0.000000e+00> : vector<16x128xf32>
    %3 = tpu.matmul %1, %2, %cst {dimension_numbers = #tpu.dot_dimension_numbers<[1], [0], [0], [1], [0, 0, 1, 1], [], []>} : vector<16x128xbf16>, vector<128x128xbf16>, vector<16x128xf32> -> vector<16x128xf32>
    %c0_3 = arith.constant 0 : index
    %c0_4 = arith.constant 0 : index
    %4 = vector.load %arg5[%c0_3, %c0_4] : memref<1x128xf32, #tpu.memory_space<vmem>>, vector<1x128xf32>
    %5 = vector.broadcast %4 : vector<1x128xf32> to vector<16x128xf32>
    %6 = arith.addf %3, %5 : vector<16x128xf32>
    %cst_5 = arith.constant 0.000000e+00 : f32
    %7 = vector.broadcast %cst_5 : f32 to vector<16x128xf32>
    %8 = arith.maximumf %6, %7 : vector<16x128xf32>
    %9 = arith.truncf %8 : vector<16x128xf32> to vector<16x128xbf16>
    %c0_6 = arith.constant 0 : index
    %c0_7 = arith.constant 0 : index
    %10 = vector.load %arg3[%c0_6, %c0_7] : memref<128x128xbf16, #tpu.memory_space<vmem>>, vector<128x128xbf16>
    %cst_8 = arith.constant dense<0.000000e+00> : vector<16x128xf32>
    %11 = tpu.matmul %9, %10, %cst_8 {dimension_numbers = #tpu.dot_dimension_numbers<[1], [0], [0], [1], [0, 0, 1, 1], [], []>} : vector<16x128xbf16>, vector<128x128xbf16>, vector<16x128xf32> -> vector<16x128xf32>
    %c0_9 = arith.constant 0 : index
    %c0_10 = arith.constant 0 : index
    %12 = vector.load %arg6[%c0_9, %c0_10] : memref<1x128xf32, #tpu.memory_space<vmem>>, vector<1x128xf32>
    %13 = vector.broadcast %12 : vector<1x128xf32> to vector<16x128xf32>
    %14 = arith.addf %11, %13 : vector<16x128xf32>
    %cst_11 = arith.constant 0.000000e+00 : f32
    %15 = vector.broadcast %cst_11 : f32 to vector<16x128xf32>
    %16 = arith.maximumf %14, %15 : vector<16x128xf32>
    %17 = arith.truncf %16 : vector<16x128xf32> to vector<16x128xbf16>
    %c0_12 = arith.constant 0 : index
    %c0_13 = arith.constant 0 : index
    %18 = vector.load %arg4[%c0_12, %c0_13] : memref<128x128xbf16, #tpu.memory_space<vmem>>, vector<128x128xbf16>
    %cst_14 = arith.constant dense<0.000000e+00> : vector<16x128xf32>
    %19 = tpu.matmul %17, %18, %cst_14 {dimension_numbers = #tpu.dot_dimension_numbers<[1], [0], [0], [1], [0, 0, 1, 1], [], []>} : vector<16x128xbf16>, vector<128x128xbf16>, vector<16x128xf32> -> vector<16x128xf32>
    %c0_15 = arith.constant 0 : index
    %c0_16 = arith.constant 0 : index
    %20 = vector.load %arg7[%c0_15, %c0_16] : memref<1x128xf32, #tpu.memory_space<vmem>>, vector<1x128xf32>
    %21 = vector.broadcast %20 : vector<1x128xf32> to vector<16x128xf32>
    %22 = arith.addf %19, %21 : vector<16x128xf32>
    %c0_17 = arith.constant 0 : index
    %c0_18 = arith.constant 0 : index
    %23 = vector.load %arg8[%c0_17, %c0_18] : memref<16x128xf32, #tpu.memory_space<vmem>>, vector<16x128xf32>
    tpu.vector_store %arg8[%c0_17, %c0_18], %22 {strides = array<i32>} : memref<16x128xf32, #tpu.memory_space<vmem>>, vector<16x128xf32>,
    return
  }
  func.func @transform_0(%arg0: i32) -> (i32, i32) {
    %c0_i32 = arith.constant 0 : i32
    %c0_i32_0 = arith.constant 0 : i32
    return %arg0, %c0_i32 : i32, i32
  }
  func.func @transform_1(%arg0: i32) -> (i32, i32) {
    %c0_i32 = arith.constant 0 : i32
    %c0_i32_0 = arith.constant 0 : i32
    %c0_i32_1 = arith.constant 0 : i32
    return %c0_i32, %c0_i32_0 : i32, i32
  }
  func.func @transform_2(%arg0: i32) -> (i32, i32) {
    %c0_i32 = arith.constant 0 : i32
    %c0_i32_0 = arith.constant 0 : i32
    %c0_i32_1 = arith.constant 0 : i32
    return %c0_i32, %c0_i32_0 : i32, i32
  }
  func.func @transform_3(%arg0: i32) -> (i32, i32) {
    %c0_i32 = arith.constant 0 : i32
    %c0_i32_0 = arith.constant 0 : i32
    %c0_i32_1 = arith.constant 0 : i32
    return %c0_i32, %c0_i32_0 : i32, i32
  }
  func.func @transform_4(%arg0: i32) -> (i32, i32) {
    %c0_i32 = arith.constant 0 : i32
    %c0_i32_0 = arith.constant 0 : i32
    %c0_i32_1 = arith.constant 0 : i32
    return %c0_i32, %c0_i32_0 : i32, i32
  }
  func.func @transform_5(%arg0: i32) -> (i32, i32) {
    %c0_i32 = arith.constant 0 : i32
    %c0_i32_0 = arith.constant 0 : i32
    %c0_i32_1 = arith.constant 0 : i32
    return %c0_i32, %c0_i32_0 : i32, i32
  }
  func.func @transform_6(%arg0: i32) -> (i32, i32) {
    %c0_i32 = arith.constant 0 : i32
    %c0_i32_0 = arith.constant 0 : i32
    %c0_i32_1 = arith.constant 0 : i32
    return %c0_i32, %c0_i32_0 : i32, i32
  }
  func.func @transform_7(%arg0: i32) -> (i32, i32) {
    %c0_i32 = arith.constant 0 : i32
    %c0_i32_0 = arith.constant 0 : i32
    return %arg0, %c0_i32 : i32, i32
  }
}

</mosaic_0001>

<llo_original>
// kernel: tpu_custom_call.1
$region0: #{tpu_custom_call.1}
  #allocation0 [shape = 'u32[]', space=smem, size = 0x4, offset = 0x4, fixed_abs, tag = 'smem constant byte address 0x4 - core index']
  #allocation1 [shape = 'u32[72,128]{1,0:T(1,128)}', space=vmem, size = 0x9000, scoped, tag = 'internal scratch']
  %s0 = inlined_call_operand.hbm [shape: f32[16,128], index: 0, kind: input, shape index: {}]
  %s1 = inlined_call_operand.hbm [shape: bf16[128,128], index: 1, kind: input, shape index: {}]
  %s2 = inlined_call_operand.hbm [shape: bf16[128,128], index: 2, kind: input, shape index: {}]
  %s3 = inlined_call_operand.hbm [shape: bf16[128,128], index: 3, kind: input, shape index: {}]
  %s4 = inlined_call_operand.vmem [shape: f32[1,128], index: 4, kind: input, shape index: {}]
  %s5 = inlined_call_operand.vmem [shape: f32[1,128], index: 5, kind: input, shape index: {}]
  %s6 = inlined_call_operand.vmem [shape: f32[1,128], index: 6, kind: input, shape index: {}]
  %s7 = inlined_call_operand.hbm [shape: f32[16,128], index: 7, kind: output, shape index: {}]
  %s8 = sld [smem:[#allocation0]]
  $region54: #{tpu_custom_call.1} parent=0
    _
  %s10 = ssub.s32 1, %s8
  %s11 = scalar_select 0, %s10, %s8
  $region1: #{tpu_custom_call.1} parent=0
    #allocation2 [shape = 'u8[8192]{0}', space=vmem, size = 0x2000, scoped, tag = 'input window, operand 0, single buffered']
    #allocation3 [shape = 's32[1]{0}', space=sflag, size = 0x4, scoped, tag = 'scoped memory for tpu_custom_call.1']
    #allocation4 [shape = 's32[1]{0}', space=sflag, size = 0x4, scoped, tag = 'scoped memory for tpu_custom_call.1']
    #allocation5 [shape = 'u8[32768]{0}', space=vmem, size = 0x8000, scoped, tag = 'input window, operand 1, single buffered']
    #allocation6 [shape = 's32[1]{0}', space=sflag, size = 0x4, scoped, tag = 'scoped memory for tpu_custom_call.1']
    #allocation7 [shape = 'u8[32768]{0}', space=vmem, size = 0x8000, scoped, tag = 'input window, operand 2, single buffered']
    #allocation8 [shape = 'u8[32768]{0}', space=vmem, size = 0x8000, scoped, tag = 'input window, operand 3, single buffered']
    #allocation9 [shape = 's32[1]{0}', space=sflag, size = 0x4, scoped, tag = 'scoped memory for tpu_custom_call.1']
    #allocation10 [shape = 'u8[8192]{0}', space=vmem, size = 0x2000, scoped, tag = 'output window, operand 0, single buffered']
    %12 = vsyncpa [#allocation3], 0
    %13 = vsyncpa [#allocation6], 0
    %14 = vsyncpa [#allocation9], 0
    %15 = vsyncpa [#allocation4], 0
    // Predicated region
    $region2: #{tpu_custom_call.1} parent=1 // pred_check
      _
    $region3: #{tpu_custom_call.1} parent=1 // pred_check_branch
      %17 = sbr.rel (0) target = $region5
    $region4: #{tpu_custom_call.1} parent=1 // pred_region
      %19 = vsyncadd [#allocation3], 0
      %s20 = sshll.u32 %s0, 4
      %s21 = int_to_ptr.hbm [resolvable:$true] %s20
      %s22 = sshll.u32 [#allocation2], 4
      %s23 = int_to_ptr.vmem [resolvable:$true] %s22
      %28 = dma.hbm_to_vmem [thread:$0]  %s21, 256, %s23, [#allocation3], 128, 128, 8
    $region5: #{tpu_custom_call.1} parent=1 // pred_fallthru
      _
    // Predicated region
    $region6: #{tpu_custom_call.1} parent=1 // pred_check
      _
    $region7: #{tpu_custom_call.1} parent=1 // pred_check_branch
      %30 = sbr.rel (0) target = $region9
    $region8: #{tpu_custom_call.1} parent=1 // pred_region
      %32 = vsyncadd [#allocation6], 0
      %s33 = sshll.u32 %s1, 4
      %s34 = int_to_ptr.hbm [resolvable:$true] %s33
      %s35 = sshll.u32 [#allocation5], 4
      %s36 = int_to_ptr.vmem [resolvable:$true] %s35
      %41 = dma.hbm_to_vmem [thread:$0]  %s34, 1024, %s36, [#allocation6], 64, 64, 4
    $region9: #{tpu_custom_call.1} parent=1 // pred_fallthru
      _
    // Predicated region
    $region10: #{tpu_custom_call.1} parent=1 // pred_check
      _
    $region11: #{tpu_custom_call.1} parent=1 // pred_check_branch
      %43 = sbr.rel (0) target = $region13
    $region12: #{tpu_custom_call.1} parent=1 // pred_region
      %45 = vsyncadd [#allocation6], 0
      %s46 = sshll.u32 %s2, 4
      %s47 = int_to_ptr.hbm [resolvable:$true] %s46
      %s48 = sshll.u32 [#allocation7], 4
      %s49 = int_to_ptr.vmem [resolvable:$true] %s48
      %54 = dma.hbm_to_vmem [thread:$0]  %s47, 1024, %s49, [#allocation6], 64, 64, 4
    $region13: #{tpu_custom_call.1} parent=1 // pred_fallthru
      _
    // Predicated region
    $region14: #{tpu_custom_call.1} parent=1 // pred_check
      _
    $region15: #{tpu_custom_call.1} parent=1 // pred_check_branch
      %56 = sbr.rel (0) target = $region17
    $region16: #{tpu_custom_call.1} parent=1 // pred_region
      %58 = vsyncadd [#allocation9], 0
      %s59 = sshll.u32 %s3, 4
      %s60 = int_to_ptr.hbm [resolvable:$true] %s59
      %s61 = sshll.u32 [#allocation8], 4
      %s62 = int_to_ptr.vmem [resolvable:$true] %s61
      %67 = dma.hbm_to_vmem [thread:$0]  %s60, 1024, %s62, [#allocation9], 64, 64, 4
    $region17: #{tpu_custom_call.1} parent=1 // pred_fallthru
      _
    // Predicated region
    $region18: #{tpu_custom_call.1} parent=1 // pred_check
      _
    $region19: #{tpu_custom_call.1} parent=1 // pred_check_branch
      %69 = sbr.rel (0) target = $region21
    $region20: #{tpu_custom_call.1} parent=1 // pred_region
      _
    $region21: #{tpu_custom_call.1} parent=1 // pred_fallthru
      _
    // Predicated region
    $region22: #{tpu_custom_call.1} parent=1 // pred_check
      _
    $region23: #{tpu_custom_call.1} parent=1 // pred_check_branch
      %71 = sbr.rel (0) target = $region25
    $region24: #{tpu_custom_call.1} parent=1 // pred_region
      _
    $region25: #{tpu_custom_call.1} parent=1 // pred_fallthru
      _
    // Predicated region
    $region26: #{tpu_custom_call.1} parent=1 // pred_check
      _
    $region27: #{tpu_custom_call.1} parent=1 // pred_check_branch
      %73 = sbr.rel (0) target = $region29
    $region28: #{tpu_custom_call.1} parent=1 // pred_region
      _
    $region29: #{tpu_custom_call.1} parent=1 // pred_fallthru
      _
    // Predicated region
    $region30: #{tpu_custom_call.1} parent=1 // pred_check
      _
    $region31: #{tpu_custom_call.1} parent=1 // pred_check_branch
      %75 = sbr.rel (0) target = $region33
    $region32: #{tpu_custom_call.1} parent=1 // pred_region
      %77 = dma.done [#allocation3], 256
    $region33: #{tpu_custom_call.1} parent=1 // pred_fallthru
      _
    // Predicated region
    $region34: #{tpu_custom_call.1} parent=1 // pred_check
      _
    $region35: #{tpu_custom_call.1} parent=1 // pred_check_branch
      %79 = sbr.rel (0) target = $region37
    $region36: #{tpu_custom_call.1} parent=1 // pred_region
      %81 = dma.done [#allocation6], 1024
    $region37: #{tpu_custom_call.1} parent=1 // pred_fallthru
      _
    // Predicated region
    $region38: #{tpu_custom_call.1} parent=1 // pred_check
      _
    $region39: #{tpu_custom_call.1} parent=1 // pred_check_branch
      %83 = sbr.rel (0) target = $region41
    $region40: #{tpu_custom_call.1} parent=1 // pred_region
      %85 = dma.done [#allocation6], 1024
    $region41: #{tpu_custom_call.1} parent=1 // pred_fallthru
      _
    // Predicated region
    $region42: #{tpu_custom_call.1} parent=1 // pred_check
      _
    $region43: #{tpu_custom_call.1} parent=1 // pred_check_branch
      %87 = sbr.rel (0) target = $region45
    $region44: #{tpu_custom_call.1} parent=1 // pred_region
      %89 = dma.done [#allocation9], 1024
    $region45: #{tpu_custom_call.1} parent=1 // pred_fallthru
      _
    %v90 = vld [vmem:[#allocation2] sm:$0xff]
    %v91 = vld [vmem:[#allocation2 + $0x8] sm:$0xff]
    %v92 = vpack.c.bf16 %v91, %v90
    %v93 = vld [vmem:[#allocation5] sm:$0xf]
    %v94 = vld [vmem:[#allocation5 + $0x4] sm:$0xf]
    %v95 = vld [vmem:[#allocation5 + $0x8] sm:$0xf]
    %v96 = vld [vmem:[#allocation5 + $0xc] sm:$0xf]
    %v97 = vld [vmem:[#allocation5 + $0x10] sm:$0xf]
    %v98 = vld [vmem:[#allocation5 + $0x14] sm:$0xf]
    %v99 = vld [vmem:[#allocation5 + $0x18] sm:$0xf]
    %v100 = vld [vmem:[#allocation5 + $0x1c] sm:$0xf]
    %v101 = vld [vmem:[#allocation5 + $0x20] sm:$0xf]
    %v102 = vld [vmem:[#allocation5 + $0x24] sm:$0xf]
    %v103 = vld [vmem:[#allocation5 + $0x28] sm:$0xf]
    %v104 = vld [vmem:[#allocation5 + $0x2c] sm:$0xf]
    %v105 = vld [vmem:[#allocation5 + $0x30] sm:$0xf]
    %v106 = vld [vmem:[#allocation5 + $0x34] sm:$0xf]
    %v107 = vld [vmem:[#allocation5 + $0x38] sm:$0xf]
    %v108 = vld [vmem:[#allocation5 + $0x3c] sm:$0xf]
    %v109 = vld [vmem:[%s4] sm:$0x1]
    %v111 = vperm.slane %v109, 0
    %v129 = vunpack.c.l.b16 %v93
    %v130 = vunpack.c.l.b16 %v94
    %v131 = vunpack.c.l.b16 %v95
    %v132 = vunpack.c.l.b16 %v96
    %v133 = vunpack.c.l.b16 %v97
    %v134 = vunpack.c.l.b16 %v98
    %v135 = vunpack.c.l.b16 %v99
    %v136 = vunpack.c.l.b16 %v100
    %v137 = vunpack.c.l.b16 %v101
    %v138 = vunpack.c.l.b16 %v102
    %v139 = vunpack.c.l.b16 %v103
    %v140 = vunpack.c.l.b16 %v104
    %v141 = vunpack.c.l.b16 %v105
    %v142 = vunpack.c.l.b16 %v106
    %v143 = vunpack.c.l.b16 %v107
    %v144 = vunpack.c.l.b16 %v108
    %v145 = vpack.c.b16 %v130, %v129
    %v146 = vpack.c.b16 %v132, %v131
    %v147 = vpack.c.b16 %v134, %v133
    %v148 = vpack.c.b16 %v136, %v135
    %v149 = vpack.c.b16 %v138, %v137
    %v150 = vpack.c.b16 %v140, %v139
    %v151 = vpack.c.b16 %v142, %v141
    %v152 = vpack.c.b16 %v144, %v143
    %161 = vmatpush.bf16.msra.mxu0 %v152
    %162 = vmatpush.bf16.msra.mxu0 %v151
    %163 = vmatpush.bf16.msra.mxu0 %v150
    %164 = vmatpush.bf16.msra.mxu0 %v149
    %165 = vmatpush.bf16.msra.mxu0 %v148
    %166 = vmatpush.bf16.msra.mxu0 %v147
    %167 = vmatpush.bf16.msra.mxu0 %v146
    %168 = vmatpush.bf16.msra.mxu0 %v145
    %169 = vmatmul.bf16.gmra.mxu0 %v92
    %v170 = vpop.f32.mrf.mxu0
    %v171 = vadd.f32 %v111, %v170
    %v172 = vpop.f32.mrf.mxu0
    %v173 = vadd.f32 %v111, %v172
    %174 = vdwg.mxu0
    %v175 = vmax.f32 %v171, 0.0
    %v176 = vmax.f32 %v173, 0.0
    %v177 = vpack.c.bf16 %v176, %v175
    %v178 = vld [vmem:[#allocation7] sm:$0xf]
    %v179 = vld [vmem:[#allocation7 + $0x4] sm:$0xf]
    %v180 = vld [vmem:[#allocation7 + $0x8] sm:$0xf]
    %v181 = vld [vmem:[#allocation7 + $0xc] sm:$0xf]
    %v182 = vld [vmem:[#allocation7 + $0x10] sm:$0xf]
    %v183 = vld [vmem:[#allocation7 + $0x14] sm:$0xf]
    %v184 = vld [vmem:[#allocation7 + $0x18] sm:$0xf]
    %v185 = vld [vmem:[#allocation7 + $0x1c] sm:$0xf]
    %v186 = vld [vmem:[#allocation7 + $0x20] sm:$0xf]
    %v187 = vld [vmem:[#allocation7 + $0x24] sm:$0xf]
    %v188 = vld [vmem:[#allocation7 + $0x28] sm:$0xf]
    %v189 = vld [vmem:[#allocation7 + $0x2c] sm:$0xf]
    %v190 = vld [vmem:[#allocation7 + $0x30] sm:$0xf]
    %v191 = vld [vmem:[#allocation7 + $0x34] sm:$0xf]
    %v192 = vld [vmem:[#allocation7 + $0x38] sm:$0xf]
    %v193 = vld [vmem:[#allocation7 + $0x3c] sm:$0xf]
    %v194 = vld [vmem:[%s5] sm:$0x1]
    %v196 = vperm.slane %v194, 0
    %v214 = vunpack.c.l.b16 %v178
    %v215 = vunpack.c.l.b16 %v179
    %v216 = vunpack.c.l.b16 %v180
    %v217 = vunpack.c.l.b16 %v181
    %v218 = vunpack.c.l.b16 %v182
    %v219 = vunpack.c.l.b16 %v183
    %v220 = vunpack.c.l.b16 %v184
    %v221 = vunpack.c.l.b16 %v185
    %v222 = vunpack.c.l.b16 %v186
    %v223 = vunpack.c.l.b16 %v187
    %v224 = vunpack.c.l.b16 %v188
    %v225 = vunpack.c.l.b16 %v189
    %v226 = vunpack.c.l.b16 %v190
    %v227 = vunpack.c.l.b16 %v191
    %v228 = vunpack.c.l.b16 %v192
    %v229 = vunpack.c.l.b16 %v193
    %v230 = vpack.c.b16 %v215, %v214
    %v231 = vpack.c.b16 %v217, %v216
    %v232 = vpack.c.b16 %v219, %v218
    %v233 = vpack.c.b16 %v221, %v220
    %v234 = vpack.c.b16 %v223, %v222
    %v235 = vpack.c.b16 %v225, %v224
    %v236 = vpack.c.b16 %v227, %v226
    %v237 = vpack.c.b16 %v229, %v228
    %246 = vmatpush.bf16.msra.mxu0 %v237
    %247 = vmatpush.bf16.msra.mxu0 %v236
    %248 = vmatpush.bf16.msra.mxu0 %v235
    %249 = vmatpush.bf16.msra.mxu0 %v234
    %250 = vmatpush.bf16.msra.mxu0 %v233
    %251 = vmatpush.bf16.msra.mxu0 %v232
    %252 = vmatpush.bf16.msra.mxu0 %v231
    %253 = vmatpush.bf16.msra.mxu0 %v230
    %254 = vmatmul.bf16.gmra.mxu0 %v177
    %v255 = vpop.f32.mrf.mxu0
    %v256 = vadd.f32 %v196, %v255
    %v257 = vpop.f32.mrf.mxu0
    %v258 = vadd.f32 %v196, %v257
    %259 = vdwg.mxu0
    %v260 = vmax.f32 %v256, 0.0
    %v261 = vmax.f32 %v258, 0.0
    %v262 = vpack.c.bf16 %v261, %v260
    %v263 = vld [vmem:[#allocation8] sm:$0xf]
    %v264 = vld [vmem:[#allocation8 + $0x4] sm:$0xf]
    %v265 = vld [vmem:[#allocation8 + $0x8] sm:$0xf]
    %v266 = vld [vmem:[#allocation8 + $0xc] sm:$0xf]
    %v267 = vld [vmem:[#allocation8 + $0x10] sm:$0xf]
    %v268 = vld [vmem:[#allocation8 + $0x14] sm:$0xf]
    %v269 = vld [vmem:[#allocation8 + $0x18] sm:$0xf]
    %v270 = vld [vmem:[#allocation8 + $0x1c] sm:$0xf]
    %v271 = vld [vmem:[#allocation8 + $0x20] sm:$0xf]
    %v272 = vld [vmem:[#allocation8 + $0x24] sm:$0xf]
    %v273 = vld [vmem:[#allocation8 + $0x28] sm:$0xf]
    %v274 = vld [vmem:[#allocation8 + $0x2c] sm:$0xf]
    %v275 = vld [vmem:[#allocation8 + $0x30] sm:$0xf]
    %v276 = vld [vmem:[#allocation8 + $0x34] sm:$0xf]
    %v277 = vld [vmem:[#allocation8 + $0x38] sm:$0xf]
    %v278 = vld [vmem:[#allocation8 + $0x3c] sm:$0xf]
    %v279 = vld [vmem:[%s6] sm:$0x1]
    %v281 = vperm.slane %v279, 0
    %v299 = vunpack.c.l.b16 %v263
    %v300 = vunpack.c.l.b16 %v264
    %v301 = vunpack.c.l.b16 %v265
    %v302 = vunpack.c.l.b16 %v266
    %v303 = vunpack.c.l.b16 %v267
    %v304 = vunpack.c.l.b16 %v268
    %v305 = vunpack.c.l.b16 %v269
    %v306 = vunpack.c.l.b16 %v270
    %v307 = vunpack.c.l.b16 %v271
    %v308 = vunpack.c.l.b16 %v272
    %v309 = vunpack.c.l.b16 %v273
    %v310 = vunpack.c.l.b16 %v274
    %v311 = vunpack.c.l.b16 %v275
    %v312 = vunpack.c.l.b16 %v276
    %v313 = vunpack.c.l.b16 %v277
    %v314 = vunpack.c.l.b16 %v278
    %v315 = vpack.c.b16 %v300, %v299
    %v316 = vpack.c.b16 %v302, %v301
    %v317 = vpack.c.b16 %v304, %v303
    %v318 = vpack.c.b16 %v306, %v305
    %v319 = vpack.c.b16 %v308, %v307
    %v320 = vpack.c.b16 %v310, %v309
    %v321 = vpack.c.b16 %v312, %v311
    %v322 = vpack.c.b16 %v314, %v313
    %331 = vmatpush.bf16.msra.mxu0 %v322
    %332 = vmatpush.bf16.msra.mxu0 %v321
    %333 = vmatpush.bf16.msra.mxu0 %v320
    %334 = vmatpush.bf16.msra.mxu0 %v319
    %335 = vmatpush.bf16.msra.mxu0 %v318
    %336 = vmatpush.bf16.msra.mxu0 %v317
    %337 = vmatpush.bf16.msra.mxu0 %v316
    %338 = vmatpush.bf16.msra.mxu0 %v315
    %339 = vmatmul.bf16.gmra.mxu0 %v262
    %v340 = vpop.f32.mrf.mxu0
    %v341 = vadd.f32 %v281, %v340
    %v342 = vpop.f32.mrf.mxu0
    %v343 = vadd.f32 %v281, %v342
    %344 = vdwg.mxu0
    %345 = vst [vmem:[#allocation10] sm:$0xff] %v341
    %346 = vst [vmem:[#allocation10 + $0x8] sm:$0xff] %v343
    // Predicated region
    $region46: #{tpu_custom_call.1} parent=1 // pred_check
      _
    $region47: #{tpu_custom_call.1} parent=1 // pred_check_branch
      %348 = sbr.rel (0) target = $region49
    $region48: #{tpu_custom_call.1} parent=1 // pred_region
      %350 = vsyncadd [#allocation4], 0
      %s351 = sshll.u32 [#allocation10], 4
      %s352 = int_to_ptr.vmem [resolvable:$true] %s351
      %s353 = sshll.u32 %s7, 4
      %s354 = int_to_ptr.hbm [resolvable:$true] %s353
      %359 = dma.vmem_to_hbm [thread:$0]  %s352, 256, %s354, [#allocation4], 128, 128, 8
    $region49: #{tpu_custom_call.1} parent=1 // pred_fallthru
      _
    // Predicated region
    $region50: #{tpu_custom_call.1} parent=1 // pred_check
      _
    $region51: #{tpu_custom_call.1} parent=1 // pred_check_branch
      %361 = sbr.rel (0) target = $region53
    $region52: #{tpu_custom_call.1} parent=1 // pred_region
      %363 = dma.done [#allocation4], 256
    $region53: #{tpu_custom_call.1} parent=1 // pred_fallthru
      _
    %364 = vsyncpa [#allocation3], 1
    %365 = vsyncpa [#allocation6], 1
    %366 = vsyncpa [#allocation9], 1
    %367 = vsyncpa [#allocation4], 1

</llo_original>
